<compile_context>
chip_gen: v7x
topology: tpu7x:2x2x1
jax: 0.10.0
libtpu: 0.0.40
codegen_flags: <defaults>
</compile_context>

<pallas_src>
import jax
import jax.numpy as jnp
from jax.experimental import pallas as pl
from jax.experimental.pallas import tpu as pltpu


# --------------------------------------------------------------------------
# Kernel 1: gamma/beta MLPs (tiny, run once, no grid)
# --------------------------------------------------------------------------
def _gamma_beta_kernel(y_ref,
                       w1g_ref, b1g_ref, w2g_ref, b2g_ref,
                       w1b_ref, b1b_ref, w2b_ref, b2b_ref,
                       gamma_ref, beta_ref):
    y = y_ref[...]                                                   # (B, cond_dim)

    # fc_gamma: Linear -> ReLU -> Linear
    h_g = jnp.maximum(
        jnp.dot(y, w1g_ref[...], preferred_element_type=jnp.float32) + b1g_ref[...],
        0.0)
    gamma_ref[...] = (jnp.dot(h_g, w2g_ref[...],
                              preferred_element_type=jnp.float32) + b2g_ref[...])

    # fc_beta: Linear -> ReLU -> Linear
    h_b = jnp.maximum(
        jnp.dot(y, w1b_ref[...], preferred_element_type=jnp.float32) + b1b_ref[...],
        0.0)
    beta_ref[...] = (jnp.dot(h_b, w2b_ref[...],
                             preferred_element_type=jnp.float32) + b2b_ref[...])


# --------------------------------------------------------------------------
# Kernel 2: streaming affine (mem-bound; one FMA stream, lane-dense store)
# --------------------------------------------------------------------------
def _affine_stream_kernel(gamma_ref, beta_ref, x_ref, o_ref):
    # gamma/beta blocks: (1, C, 1)  — lane-broadcast against the spatial axis.
    # x/o blocks:        (1, C, TS)
    o_ref[...] = gamma_ref[...] * x_ref[...] + beta_ref[...]


def _choose_spatial_tile(C, S, max_block_bytes=2 * 1024 * 1024):
    """Pick a lane-dense spatial tile: multiple of 128, block <= ~2 MiB."""
    if S % 128 != 0:
        # Block must equal the full dim if it is not a multiple of 128.
        return S
    max_lanes = max_block_bytes // (4 * max(C, 1))
    ts = min(S, 2048, max(128, (max_lanes // 128) * 128))
    ts = max(128, (ts // 128) * 128)
    return ts


def affine_forward(x, y, params):
    """x: (B, C, H, W) f32, y: (B, cond_dim) f32 -> (B, C, H, W) f32."""
    B, C, H, W = x.shape
    S = H * W

    # ---- gamma / beta: computed once, outside the streaming loop ----------
    vmem = pl.BlockSpec(memory_space=pltpu.MemorySpace.VMEM)
    gamma, beta = pl.pallas_call(
        _gamma_beta_kernel,
        out_shape=(jax.ShapeDtypeStruct((B, C), jnp.float32),
                   jax.ShapeDtypeStruct((B, C), jnp.float32)),
        in_specs=[vmem] * 9,
        out_specs=(vmem, vmem),
    )(y,
      params["w1g"], params["b1g"], params["w2g"], params["b2g"],
      params["w1b"], params["b1b"], params["w2b"], params["b2b"])

    gamma3 = gamma.reshape(B, C, 1)
    beta3 = beta.reshape(B, C, 1)
    x2 = x.reshape(B, C, S)

    # ---- streaming affine: grid over (batch, spatial tiles) ---------------
    TS = _choose_spatial_tile(C, S)
    grid = (B, pl.cdiv(S, TS))

    out = pl.pallas_call(
        _affine_stream_kernel,
        out_shape=jax.ShapeDtypeStruct((B, C, S), x.dtype),
        grid=grid,
        in_specs=[
            pl.BlockSpec((1, C, 1), lambda b, s: (b, 0, 0)),    # gamma (resident per b)
            pl.BlockSpec((1, C, 1), lambda b, s: (b, 0, 0)),    # beta
            pl.BlockSpec((1, C, TS), lambda b, s: (b, 0, s)),   # x tile
        ],
        out_specs=pl.BlockSpec((1, C, TS), lambda b, s: (b, 0, s)),
        compiler_params=pltpu.CompilerParams(
            dimension_semantics=("parallel", "parallel")),
    )(gamma3, beta3, x2)

    return out.reshape(B, C, H, W)


# --------------------------------------------------------------------------
# Params / reference
# --------------------------------------------------------------------------
def init_params(key, cond_dim, num_features):
    """Deterministic init mirroring nn.Linear defaults + _Affine._initialize()."""
    k1, k2, k3, k4 = jax.random.split(key, 4)
    bound1 = 1.0 / jnp.sqrt(cond_dim)
    # linear1 of fc_gamma / fc_beta: default uniform init, stored as (in, out)
    w1g = jax.random.uniform(k1, (cond_dim, num_features), jnp.float32, -bound1, bound1)
    b1g = jax.random.uniform(k2, (1, num_features), jnp.float32, -bound1, bound1)
    w1b = jax.random.uniform(k3, (cond_dim, num_features), jnp.float32, -bound1, bound1)
    b1b = jax.random.uniform(k4, (1, num_features), jnp.float32, -bound1, bound1)
    # linear2: _initialize() -> gamma: W=0, b=1 ; beta: W=0, b=0
    w2g = jnp.zeros((num_features, num_features), jnp.float32)
    b2g = jnp.ones((1, num_features), jnp.float32)
    w2b = jnp.zeros((num_features, num_features), jnp.float32)
    b2b = jnp.zeros((1, num_features), jnp.float32)
    return dict(w1g=w1g, b1g=b1g, w2g=w2g, b2g=b2g,
                w1b=w1b, b1b=b1b, w2b=w2b, b2b=b2b)


def _reference(x, y, p):
    h_g = jnp.maximum(y @ p["w1g"] + p["b1g"], 0.0)
    gamma = h_g @ p["w2g"] + p["b2g"]
    h_b = jnp.maximum(y @ p["w1b"] + p["b1b"], 0.0)
    beta = h_b @ p["w2b"] + p["b2b"]
    return gamma[:, :, None, None] * x + beta[:, :, None, None]


if __name__ == "__main__":
    B, C, H, W = 2, 8, 16, 16      # x: (B, C, H, W), num_features = C
    cond_dim = 32                  # y: (B, cond_dim)

    key = jax.random.PRNGKey(0)
    kx, ky, kp = jax.random.split(key, 3)
    x = jax.random.normal(kx, (B, C, H, W), jnp.float32)
    y = jax.random.normal(ky, (B, cond_dim), jnp.float32)
    params = init_params(kp, cond_dim, C)

    out = affine_forward(x, y, params)
    out = jax.block_until_ready(out)

    ref = _reference(x, y, params)
    assert out.shape == (B, C, H, W)
    assert jnp.allclose(out, ref, atol=1e-5, rtol=1e-5), "mismatch vs reference"
    print("KERNEL_OK")
</pallas_src>

<mosaic_0001>
module attributes {stable_mosaic.version = 11 : i64} {
  func.func @_gamma_beta_kernel(%arg0: memref<2x32xf32, #tpu.memory_space<vmem>>, %arg1: memref<32x8xf32, #tpu.memory_space<vmem>>, %arg2: memref<1x8xf32, #tpu.memory_space<vmem>>, %arg3: memref<8x8xf32, #tpu.memory_space<vmem>>, %arg4: memref<1x8xf32, #tpu.memory_space<vmem>>, %arg5: memref<32x8xf32, #tpu.memory_space<vmem>>, %arg6: memref<1x8xf32, #tpu.memory_space<vmem>>, %arg7: memref<8x8xf32, #tpu.memory_space<vmem>>, %arg8: memref<1x8xf32, #tpu.memory_space<vmem>>, %arg9: memref<2x8xf32, #tpu.memory_space<vmem>>, %arg10: memref<2x8xf32, #tpu.memory_space<vmem>>) attributes {dimension_semantics = [], scalar_prefetch = 0 : i64, scratch_operands = 0 : i64, tpu.core_type = #tpu.core_type<tc>} {
    %c0 = arith.constant 0 : index
    %c0_0 = arith.constant 0 : index
    %0 = vector.load %arg0[%c0, %c0_0] : memref<2x32xf32, #tpu.memory_space<vmem>>, vector<2x32xf32>
    %c0_1 = arith.constant 0 : index
    %c0_2 = arith.constant 0 : index
    %1 = vector.load %arg1[%c0_1, %c0_2] : memref<32x8xf32, #tpu.memory_space<vmem>>, vector<32x8xf32>
    %cst = arith.constant dense<0.000000e+00> : vector<2x8xf32>
    %2 = tpu.matmul %0, %1, %cst {dimension_numbers = #tpu.dot_dimension_numbers<[1], [0], [0], [1], [0, 0, 1, 1], [], []>} : vector<2x32xf32>, vector<32x8xf32>, vector<2x8xf32> -> vector<2x8xf32>
    %c0_3 = arith.constant 0 : index
    %c0_4 = arith.constant 0 : index
    %3 = vector.load %arg2[%c0_3, %c0_4] : memref<1x8xf32, #tpu.memory_space<vmem>>, vector<1x8xf32>
    %4 = vector.broadcast %3 : vector<1x8xf32> to vector<2x8xf32>
    %5 = arith.addf %2, %4 : vector<2x8xf32>
    %cst_5 = arith.constant 0.000000e+00 : f32
    %6 = vector.broadcast %cst_5 : f32 to vector<2x8xf32>
    %7 = arith.maximumf %5, %6 : vector<2x8xf32>
    %c0_6 = arith.constant 0 : index
    %c0_7 = arith.constant 0 : index
    %8 = vector.load %arg3[%c0_6, %c0_7] : memref<8x8xf32, #tpu.memory_space<vmem>>, vector<8x8xf32>
    %cst_8 = arith.constant dense<0.000000e+00> : vector<2x8xf32>
    %9 = tpu.matmul %7, %8, %cst_8 {dimension_numbers = #tpu.dot_dimension_numbers<[1], [0], [0], [1], [0, 0, 1, 1], [], []>} : vector<2x8xf32>, vector<8x8xf32>, vector<2x8xf32> -> vector<2x8xf32>
    %c0_9 = arith.constant 0 : index
    %c0_10 = arith.constant 0 : index
    %10 = vector.load %arg4[%c0_9, %c0_10] : memref<1x8xf32, #tpu.memory_space<vmem>>, vector<1x8xf32>
    %11 = vector.broadcast %10 : vector<1x8xf32> to vector<2x8xf32>
    %12 = arith.addf %9, %11 : vector<2x8xf32>
    %c0_11 = arith.constant 0 : index
    %c0_12 = arith.constant 0 : index
    %13 = vector.load %arg9[%c0_11, %c0_12] : memref<2x8xf32, #tpu.memory_space<vmem>>, vector<2x8xf32>
    tpu.vector_store %arg9[%c0_11, %c0_12], %12 {strides = array<i32>} : memref<2x8xf32, #tpu.memory_space<vmem>>, vector<2x8xf32>,
    %c0_13 = arith.constant 0 : index
    %c0_14 = arith.constant 0 : index
    %14 = vector.load %arg5[%c0_13, %c0_14] : memref<32x8xf32, #tpu.memory_space<vmem>>, vector<32x8xf32>
    %cst_15 = arith.constant dense<0.000000e+00> : vector<2x8xf32>
    %15 = tpu.matmul %0, %14, %cst_15 {dimension_numbers = #tpu.dot_dimension_numbers<[1], [0], [0], [1], [0, 0, 1, 1], [], []>} : vector<2x32xf32>, vector<32x8xf32>, vector<2x8xf32> -> vector<2x8xf32>
    %c0_16 = arith.constant 0 : index
    %c0_17 = arith.constant 0 : index
    %16 = vector.load %arg6[%c0_16, %c0_17] : memref<1x8xf32, #tpu.memory_space<vmem>>, vector<1x8xf32>
    %17 = vector.broadcast %16 : vector<1x8xf32> to vector<2x8xf32>
    %18 = arith.addf %15, %17 : vector<2x8xf32>
    %cst_18 = arith.constant 0.000000e+00 : f32
    %19 = vector.broadcast %cst_18 : f32 to vector<2x8xf32>
    %20 = arith.maximumf %18, %19 : vector<2x8xf32>
    %c0_19 = arith.constant 0 : index
    %c0_20 = arith.constant 0 : index
    %21 = vector.load %arg7[%c0_19, %c0_20] : memref<8x8xf32, #tpu.memory_space<vmem>>, vector<8x8xf32>
    %cst_21 = arith.constant dense<0.000000e+00> : vector<2x8xf32>
    %22 = tpu.matmul %20, %21, %cst_21 {dimension_numbers = #tpu.dot_dimension_numbers<[1], [0], [0], [1], [0, 0, 1, 1], [], []>} : vector<2x8xf32>, vector<8x8xf32>, vector<2x8xf32> -> vector<2x8xf32>
    %c0_22 = arith.constant 0 : index
    %c0_23 = arith.constant 0 : index
    %23 = vector.load %arg8[%c0_22, %c0_23] : memref<1x8xf32, #tpu.memory_space<vmem>>, vector<1x8xf32>
    %24 = vector.broadcast %23 : vector<1x8xf32> to vector<2x8xf32>
    %25 = arith.addf %22, %24 : vector<2x8xf32>
    %c0_24 = arith.constant 0 : index
    %c0_25 = arith.constant 0 : index
    %26 = vector.load %arg10[%c0_24, %c0_25] : memref<2x8xf32, #tpu.memory_space<vmem>>, vector<2x8xf32>
    tpu.vector_store %arg10[%c0_24, %c0_25], %25 {strides = array<i32>} : memref<2x8xf32, #tpu.memory_space<vmem>>, vector<2x8xf32>,
    return
  }
}

</mosaic_0001>

<llo_original>
// kernel: tpu_custom_call.1
$region0: #{tpu_custom_call.1}
  #allocation0 [shape = 'u32[]', space=smem, size = 0x4, offset = 0x4, fixed_abs, tag = 'smem constant byte address 0x4 - core index']
  #allocation1 [shape = 'u32[144,128]{1,0:T(1,128)}', space=vmem, size = 0x12000, scoped, tag = 'internal scratch']
  %s0 = inlined_call_operand.vmem [shape: f32[2,32], index: 0, kind: input, shape index: {}]
  %s1 = inlined_call_operand.vmem [shape: f32[32,8], index: 1, kind: input, shape index: {}]
  %s2 = inlined_call_operand.vmem [shape: f32[1,8], index: 2, kind: input, shape index: {}]
  %s3 = inlined_call_operand.vmem [shape: f32[8,8], index: 3, kind: input, shape index: {}]
  %s4 = inlined_call_operand.vmem [shape: f32[1,8], index: 4, kind: input, shape index: {}]
  %s5 = inlined_call_operand.vmem [shape: f32[32,8], index: 5, kind: input, shape index: {}]
  %s6 = inlined_call_operand.vmem [shape: f32[1,8], index: 6, kind: input, shape index: {}]
  %s7 = inlined_call_operand.vmem [shape: f32[8,8], index: 7, kind: input, shape index: {}]
  %s8 = inlined_call_operand.vmem [shape: f32[1,8], index: 8, kind: input, shape index: {}]
  %s9 = inlined_call_operand.hbm [shape: f32[2,8], index: 9, kind: output, shape index: {0}]
  %s10 = inlined_call_operand.hbm [shape: f32[2,8], index: 10, kind: output, shape index: {1}]
  %11 = xla_tuple %s9, %s10
  %s12 = sld [smem:[#allocation0]]
  $region54: #{tpu_custom_call.1} parent=0
    _
  %s14 = ssub.s32 1, %s12
  %s15 = scalar_select 0, %s14, %s12
  $region1: #{tpu_custom_call.1} parent=0
    #allocation2 [shape = 'u8[1024]{0}', space=vmem, size = 0x400, scoped, tag = 'output window, operand 0, single buffered']
    #allocation3 [shape = 's32[1]{0}', space=sflag, size = 0x4, scoped, tag = 'scoped memory for tpu_custom_call.1']
    #allocation4 [shape = 'u8[1024]{0}', space=vmem, size = 0x400, scoped, tag = 'output window, operand 1, single buffered']
    #allocation5 [shape = 's32[1]{0}', space=sflag, size = 0x4, scoped, tag = 'scoped memory for tpu_custom_call.1']
    %16 = vsyncpa [#allocation3], 0
    %17 = vsyncpa [#allocation5], 0
    // Predicated region
    $region2: #{tpu_custom_call.1} parent=1 // pred_check
      _
    $region3: #{tpu_custom_call.1} parent=1 // pred_check_branch
      %19 = sbr.rel (0) target = $region5
    $region4: #{tpu_custom_call.1} parent=1 // pred_region
      _
    $region5: #{tpu_custom_call.1} parent=1 // pred_fallthru
      _
    // Predicated region
    $region6: #{tpu_custom_call.1} parent=1 // pred_check
      _
    $region7: #{tpu_custom_call.1} parent=1 // pred_check_branch
      %21 = sbr.rel (0) target = $region9
    $region8: #{tpu_custom_call.1} parent=1 // pred_region
      _
    $region9: #{tpu_custom_call.1} parent=1 // pred_fallthru
      _
    // Predicated region
    $region10: #{tpu_custom_call.1} parent=1 // pred_check
      _
    $region11: #{tpu_custom_call.1} parent=1 // pred_check_branch
      %23 = sbr.rel (0) target = $region13
    $region12: #{tpu_custom_call.1} parent=1 // pred_region
      _
    $region13: #{tpu_custom_call.1} parent=1 // pred_fallthru
      _
    // Predicated region
    $region14: #{tpu_custom_call.1} parent=1 // pred_check
      _
    $region15: #{tpu_custom_call.1} parent=1 // pred_check_branch
      %25 = sbr.rel (0) target = $region17
    $region16: #{tpu_custom_call.1} parent=1 // pred_region
      _
    $region17: #{tpu_custom_call.1} parent=1 // pred_fallthru
      _
    // Predicated region
    $region18: #{tpu_custom_call.1} parent=1 // pred_check
      _
    $region19: #{tpu_custom_call.1} parent=1 // pred_check_branch
      %27 = sbr.rel (0) target = $region21
    $region20: #{tpu_custom_call.1} parent=1 // pred_region
      _
    $region21: #{tpu_custom_call.1} parent=1 // pred_fallthru
      _
    // Predicated region
    $region22: #{tpu_custom_call.1} parent=1 // pred_check
      _
    $region23: #{tpu_custom_call.1} parent=1 // pred_check_branch
      %29 = sbr.rel (0) target = $region25
    $region24: #{tpu_custom_call.1} parent=1 // pred_region
      _
    $region25: #{tpu_custom_call.1} parent=1 // pred_fallthru
      _
    // Predicated region
    $region26: #{tpu_custom_call.1} parent=1 // pred_check
      _
    $region27: #{tpu_custom_call.1} parent=1 // pred_check_branch
      %31 = sbr.rel (0) target = $region29
    $region28: #{tpu_custom_call.1} parent=1 // pred_region
      _
    $region29: #{tpu_custom_call.1} parent=1 // pred_fallthru
      _
    // Predicated region
    $region30: #{tpu_custom_call.1} parent=1 // pred_check
      _
    $region31: #{tpu_custom_call.1} parent=1 // pred_check_branch
      %33 = sbr.rel (0) target = $region33
    $region32: #{tpu_custom_call.1} parent=1 // pred_region
      _
    $region33: #{tpu_custom_call.1} parent=1 // pred_fallthru
      _
    // Predicated region
    $region34: #{tpu_custom_call.1} parent=1 // pred_check
      _
    $region35: #{tpu_custom_call.1} parent=1 // pred_check_branch
      %35 = sbr.rel (0) target = $region37
    $region36: #{tpu_custom_call.1} parent=1 // pred_region
      _
    $region37: #{tpu_custom_call.1} parent=1 // pred_fallthru
      _
    %v36 = vld [vmem:[%s0] sm:$0x3]
    %v37 = vld [vmem:[%s1] sm:$0xff]
    %v38 = vld [vmem:[%s1 + $0x8] sm:$0xff]
    %v39 = vld [vmem:[%s1 + $0x10] sm:$0xff]
    %v40 = vld [vmem:[%s1 + $0x18] sm:$0xff]
    %v41 = vld [vmem:[%s2] sm:$0x1]
    %v43 = vlaneseq
    %v44 = vshrl.u32 %v43, 7
    %v45 = vsub.s32 0, %v44
    %v46 = vrot.slane %v41, %v45
    %vm48 = vcmask 261120
    %v50 = vsel %vm48, %v36, 0
    %52 = vmatprep.subr.mxu0 0.0
    %53 = vmatpush1.msra.mxu0 %v37
    %54 = vmatprep.subr.mxu0 0.0
    %55 = vmatpush1.msra.mxu0 %v38
    %56 = vmatprep.subr.mxu0 0.0
    %57 = vmatpush1.msra.mxu0 %v39
    %58 = vmatprep.subr.mxu0 0.0
    %59 = vmatpush1.msra.mxu0 %v40
    %60 = vmatprep.subr.mxu0 0.0
    %61 = vmatpush1.msra.mxu0 0.0
    %62 = vmatprep.subr.mxu0 0.0
    %63 = vmatpush1.msra.mxu0 0.0
    %64 = vmatprep.subr.mxu0 0.0
    %65 = vmatpush1.msra.mxu0 0.0
    %66 = vmatprep.subr.mxu0 0.0
    %67 = vmatpush1.msra.mxu0 0.0
    %68 = vmatprep.subr.mxu0 0.0
    %69 = vmatpush1.msra.mxu0 0.0
    %70 = vmatprep.subr.mxu0 0.0
    %71 = vmatpush1.msra.mxu0 0.0
    %72 = vmatprep.subr.mxu0 0.0
    %73 = vmatpush1.msra.mxu0 0.0
    %74 = vmatprep.subr.mxu0 0.0
    %75 = vmatpush1.msra.mxu0 0.0
    %76 = vmatprep.subr.mxu0 0.0
    %77 = vmatpush1.msra.mxu0 0.0
    %78 = vmatprep.subr.mxu0 0.0
    %79 = vmatpush1.msra.mxu0 0.0
    %80 = vmatprep.subr.mxu0 0.0
    %81 = vmatpush1.msra.mxu0 0.0
    %82 = vmatprep.subr.mxu0 0.0
    %83 = vmatpush1.msra.mxu0 0.0
    %84 = vmatprep.subr.mxu0 0.0
    %85 = vmatpush1.msra.mxu0 0.0
    %86 = vmatprep.subr.mxu0 0.0
    %87 = vmatpush1.msra.mxu0 0.0
    %88 = vmatprep.subr.mxu0 0.0
    %89 = vmatpush1.msra.mxu0 0.0
    %90 = vmatprep.subr.mxu0 0.0
    %91 = vmatpush1.msra.mxu0 0.0
    %92 = vmatprep.subr.mxu0 0.0
    %93 = vmatpush1.msra.mxu0 0.0
    %94 = vmatprep.subr.mxu0 0.0
    %95 = vmatpush1.msra.mxu0 0.0
    %96 = vmatprep.subr.mxu0 0.0
    %97 = vmatpush1.msra.mxu0 0.0
    %98 = vmatprep.subr.mxu0 0.0
    %99 = vmatpush1.msra.mxu0 0.0
    %100 = vmatprep.subr.mxu0 0.0
    %101 = vmatpush1.msra.mxu0 0.0
    %102 = vmatprep.subr.mxu0 0.0
    %103 = vmatpush1.msra.mxu0 0.0
    %104 = vmatprep.subr.mxu0 0.0
    %105 = vmatpush1.msra.mxu0 0.0
    %106 = vmatprep.subr.mxu0 0.0
    %107 = vmatpush1.msra.mxu0 0.0
    %108 = vmatprep.subr.mxu0 0.0
    %109 = vmatpush1.msra.mxu0 0.0
    %110 = vmatprep.subr.mxu0 0.0
    %111 = vmatpush1.msra.mxu0 0.0
    %112 = vmatprep.subr.mxu0 0.0
    %113 = vmatpush1.msra.mxu0 0.0
    %114 = vmatprep.subr.mxu0 0.0
    %115 = vmatpush1.msra.mxu0 0.0
    %116 = vmatprep.mubr.f32.mxu0 0.0
    %117 = vmatmul.mubr.f32.gmra.mrb[0].mxu0 %v50
    %v118 = vpop.f32.mrb[0].mxu0
    %v119 = vadd.f32 %v46, %v118
    %v120 = vpop.f32.mrb[0].mxu0
    %121 = vdwg.mxu0
    %v122 = vmax.f32 %v119, 0.0
    %v123 = vld [vmem:[%s3] sm:$0xff]
    %v124 = vld [vmem:[%s4] sm:$0x1]
    %v126 = vlaneseq
    %v127 = vshrl.u32 %v126, 7
    %v128 = vsub.s32 0, %v127
    %v129 = vrot.slane %v124, %v128
    %vm131 = vcmask 64512
    %v133 = vsel %vm131, %v122, 0
    %135 = vmatprep.subr.mxu0 0.0
    %136 = vmatpush1.msra.mxu0 %v123
    %137 = vmatprep.subr.mxu0 0.0
    %138 = vmatpush1.msra.mxu0 0.0
    %139 = vmatprep.subr.mxu0 0.0
    %140 = vmatpush1.msra.mxu0 0.0
    %141 = vmatprep.subr.mxu0 0.0
    %142 = vmatpush1.msra.mxu0 0.0
    %143 = vmatprep.subr.mxu0 0.0
    %144 = vmatpush1.msra.mxu0 0.0
    %145 = vmatprep.subr.mxu0 0.0
    %146 = vmatpush1.msra.mxu0 0.0
    %147 = vmatprep.subr.mxu0 0.0
    %148 = vmatpush1.msra.mxu0 0.0
    %149 = vmatprep.subr.mxu0 0.0
    %150 = vmatpush1.msra.mxu0 0.0
    %151 = vmatprep.subr.mxu0 0.0
    %152 = vmatpush1.msra.mxu0 0.0
    %153 = vmatprep.subr.mxu0 0.0
    %154 = vmatpush1.msra.mxu0 0.0
    %155 = vmatprep.subr.mxu0 0.0
    %156 = vmatpush1.msra.mxu0 0.0
    %157 = vmatprep.subr.mxu0 0.0
    %158 = vmatpush1.msra.mxu0 0.0
    %159 = vmatprep.subr.mxu0 0.0
    %160 = vmatpush1.msra.mxu0 0.0
    %161 = vmatprep.subr.mxu0 0.0
    %162 = vmatpush1.msra.mxu0 0.0
    %163 = vmatprep.subr.mxu0 0.0
    %164 = vmatpush1.msra.mxu0 0.0
    %165 = vmatprep.subr.mxu0 0.0
    %166 = vmatpush1.msra.mxu0 0.0
    %167 = vmatprep.subr.mxu0 0.0
    %168 = vmatpush1.msra.mxu0 0.0
    %169 = vmatprep.subr.mxu0 0.0
    %170 = vmatpush1.msra.mxu0 0.0
    %171 = vmatprep.subr.mxu0 0.0
    %172 = vmatpush1.msra.mxu0 0.0
    %173 = vmatprep.subr.mxu0 0.0
    %174 = vmatpush1.msra.mxu0 0.0
    %175 = vmatprep.subr.mxu0 0.0
    %176 = vmatpush1.msra.mxu0 0.0
    %177 = vmatprep.subr.mxu0 0.0
    %178 = vmatpush1.msra.mxu0 0.0
    %179 = vmatprep.subr.mxu0 0.0
    %180 = vmatpush1.msra.mxu0 0.0
    %181 = vmatprep.subr.mxu0 0.0
    %182 = vmatpush1.msra.mxu0 0.0
    %183 = vmatprep.subr.mxu0 0.0
    %184 = vmatpush1.msra.mxu0 0.0
    %185 = vmatprep.subr.mxu0 0.0
    %186 = vmatpush1.msra.mxu0 0.0
    %187 = vmatprep.subr.mxu0 0.0
    %188 = vmatpush1.msra.mxu0 0.0
    %189 = vmatprep.subr.mxu0 0.0
    %190 = vmatpush1.msra.mxu0 0.0
    %191 = vmatprep.subr.mxu0 0.0
    %192 = vmatpush1.msra.mxu0 0.0
    %193 = vmatprep.subr.mxu0 0.0
    %194 = vmatpush1.msra.mxu0 0.0
    %195 = vmatprep.subr.mxu0 0.0
    %196 = vmatpush1.msra.mxu0 0.0
    %197 = vmatprep.subr.mxu0 0.0
    %198 = vmatpush1.msra.mxu0 0.0
    %199 = vmatprep.mubr.f32.mxu0 0.0
    %200 = vmatmul.mubr.f32.gmra.mrb[0].mxu0 %v133
    %v201 = vpop.f32.mrb[0].mxu0
    %v202 = vadd.f32 %v129, %v201
    %v203 = vpop.f32.mrb[0].mxu0
    %204 = vdwg.mxu0
    %vm205 = vcmask 58368
    %206 = vst.msk [vmem:[#allocation2] sm:$0x3] %vm205, %v202
    %v207 = vld [vmem:[%s5] sm:$0xff]
    %v208 = vld [vmem:[%s5 + $0x8] sm:$0xff]
    %v209 = vld [vmem:[%s5 + $0x10] sm:$0xff]
    %v210 = vld [vmem:[%s5 + $0x18] sm:$0xff]
    %v211 = vld [vmem:[%s6] sm:$0x1]
    %v213 = vlaneseq
    %v214 = vshrl.u32 %v213, 7
    %v215 = vsub.s32 0, %v214
    %v216 = vrot.slane %v211, %v215
    %218 = vmatprep.subr.mxu0 0.0
    %219 = vmatpush1.msra.mxu0 %v207
    %220 = vmatprep.subr.mxu0 0.0
    %221 = vmatpush1.msra.mxu0 %v208
    %222 = vmatprep.subr.mxu0 0.0
    %223 = vmatpush1.msra.mxu0 %v209
    %224 = vmatprep.subr.mxu0 0.0
    %225 = vmatpush1.msra.mxu0 %v210
    %226 = vmatprep.subr.mxu0 0.0
    %227 = vmatpush1.msra.mxu0 0.0
    %228 = vmatprep.subr.mxu0 0.0
    %229 = vmatpush1.msra.mxu0 0.0
    %230 = vmatprep.subr.mxu0 0.0
    %231 = vmatpush1.msra.mxu0 0.0
    %232 = vmatprep.subr.mxu0 0.0
    %233 = vmatpush1.msra.mxu0 0.0
    %234 = vmatprep.subr.mxu0 0.0
    %235 = vmatpush1.msra.mxu0 0.0
    %236 = vmatprep.subr.mxu0 0.0
    %237 = vmatpush1.msra.mxu0 0.0
    %238 = vmatprep.subr.mxu0 0.0
    %239 = vmatpush1.msra.mxu0 0.0
    %240 = vmatprep.subr.mxu0 0.0
    %241 = vmatpush1.msra.mxu0 0.0
    %242 = vmatprep.subr.mxu0 0.0
    %243 = vmatpush1.msra.mxu0 0.0
    %244 = vmatprep.subr.mxu0 0.0
    %245 = vmatpush1.msra.mxu0 0.0
    %246 = vmatprep.subr.mxu0 0.0
    %247 = vmatpush1.msra.mxu0 0.0
    %248 = vmatprep.subr.mxu0 0.0
    %249 = vmatpush1.msra.mxu0 0.0
    %250 = vmatprep.subr.mxu0 0.0
    %251 = vmatpush1.msra.mxu0 0.0
    %252 = vmatprep.subr.mxu0 0.0
    %253 = vmatpush1.msra.mxu0 0.0
    %254 = vmatprep.subr.mxu0 0.0
    %255 = vmatpush1.msra.mxu0 0.0
    %256 = vmatprep.subr.mxu0 0.0
    %257 = vmatpush1.msra.mxu0 0.0
    %258 = vmatprep.subr.mxu0 0.0
    %259 = vmatpush1.msra.mxu0 0.0
    %260 = vmatprep.subr.mxu0 0.0
    %261 = vmatpush1.msra.mxu0 0.0
    %262 = vmatprep.subr.mxu0 0.0
    %263 = vmatpush1.msra.mxu0 0.0
    %264 = vmatprep.subr.mxu0 0.0
    %265 = vmatpush1.msra.mxu0 0.0
    %266 = vmatprep.subr.mxu0 0.0
    %267 = vmatpush1.msra.mxu0 0.0
    %268 = vmatprep.subr.mxu0 0.0
    %269 = vmatpush1.msra.mxu0 0.0
    %270 = vmatprep.subr.mxu0 0.0
    %271 = vmatpush1.msra.mxu0 0.0
    %272 = vmatprep.subr.mxu0 0.0
    %273 = vmatpush1.msra.mxu0 0.0
    %274 = vmatprep.subr.mxu0 0.0
    %275 = vmatpush1.msra.mxu0 0.0
    %276 = vmatprep.subr.mxu0 0.0
    %277 = vmatpush1.msra.mxu0 0.0
    %278 = vmatprep.subr.mxu0 0.0
    %279 = vmatpush1.msra.mxu0 0.0
    %280 = vmatprep.subr.mxu0 0.0
    %281 = vmatpush1.msra.mxu0 0.0
    %282 = vmatprep.mubr.f32.mxu0 0.0
    %283 = vmatmul.mubr.f32.gmra.mrb[0].mxu0 %v50
    %v284 = vpop.f32.mrb[0].mxu0
    %v285 = vadd.f32 %v216, %v284
    %v286 = vpop.f32.mrb[0].mxu0
    %287 = vdwg.mxu0
    %v288 = vmax.f32 %v285, 0.0
    %v289 = vld [vmem:[%s7] sm:$0xff]
    %v290 = vld [vmem:[%s8] sm:$0x1]
    %v292 = vlaneseq
    %v293 = vshrl.u32 %v292, 7
    %v294 = vsub.s32 0, %v293
    %v295 = vrot.slane %v290, %v294
    %v298 = vsel %vm131, %v288, 0
    %300 = vmatprep.subr.mxu0 0.0
    %301 = vmatpush1.msra.mxu0 %v289
    %302 = vmatprep.subr.mxu0 0.0
    %303 = vmatpush1.msra.mxu0 0.0
    %304 = vmatprep.subr.mxu0 0.0
    %305 = vmatpush1.msra.mxu0 0.0
    %306 = vmatprep.subr.mxu0 0.0
    %307 = vmatpush1.msra.mxu0 0.0
    %308 = vmatprep.subr.mxu0 0.0
    %309 = vmatpush1.msra.mxu0 0.0
    %310 = vmatprep.subr.mxu0 0.0
    %311 = vmatpush1.msra.mxu0 0.0
    %312 = vmatprep.subr.mxu0 0.0
    %313 = vmatpush1.msra.mxu0 0.0
    %314 = vmatprep.subr.mxu0 0.0
    %315 = vmatpush1.msra.mxu0 0.0
    %316 = vmatprep.subr.mxu0 0.0
    %317 = vmatpush1.msra.mxu0 0.0
    %318 = vmatprep.subr.mxu0 0.0
    %319 = vmatpush1.msra.mxu0 0.0
    %320 = vmatprep.subr.mxu0 0.0
    %321 = vmatpush1.msra.mxu0 0.0
    %322 = vmatprep.subr.mxu0 0.0
    %323 = vmatpush1.msra.mxu0 0.0
    %324 = vmatprep.subr.mxu0 0.0
    %325 = vmatpush1.msra.mxu0 0.0
    %326 = vmatprep.subr.mxu0 0.0
    %327 = vmatpush1.msra.mxu0 0.0
    %328 = vmatprep.subr.mxu0 0.0
    %329 = vmatpush1.msra.mxu0 0.0
    %330 = vmatprep.subr.mxu0 0.0
    %331 = vmatpush1.msra.mxu0 0.0
    %332 = vmatprep.subr.mxu0 0.0
    %333 = vmatpush1.msra.mxu0 0.0
    %334 = vmatprep.subr.mxu0 0.0
    %335 = vmatpush1.msra.mxu0 0.0
    %336 = vmatprep.subr.mxu0 0.0
    %337 = vmatpush1.msra.mxu0 0.0
    %338 = vmatprep.subr.mxu0 0.0
    %339 = vmatpush1.msra.mxu0 0.0
    %340 = vmatprep.subr.mxu0 0.0
    %341 = vmatpush1.msra.mxu0 0.0
    %342 = vmatprep.subr.mxu0 0.0
    %343 = vmatpush1.msra.mxu0 0.0
    %344 = vmatprep.subr.mxu0 0.0
    %345 = vmatpush1.msra.mxu0 0.0
    %346 = vmatprep.subr.mxu0 0.0
    %347 = vmatpush1.msra.mxu0 0.0
    %348 = vmatprep.subr.mxu0 0.0
    %349 = vmatpush1.msra.mxu0 0.0
    %350 = vmatprep.subr.mxu0 0.0
    %351 = vmatpush1.msra.mxu0 0.0
    %352 = vmatprep.subr.mxu0 0.0
    %353 = vmatpush1.msra.mxu0 0.0
    %354 = vmatprep.subr.mxu0 0.0
    %355 = vmatpush1.msra.mxu0 0.0
    %356 = vmatprep.subr.mxu0 0.0
    %357 = vmatpush1.msra.mxu0 0.0
    %358 = vmatprep.subr.mxu0 0.0
    %359 = vmatpush1.msra.mxu0 0.0
    %360 = vmatprep.subr.mxu0 0.0
    %361 = vmatpush1.msra.mxu0 0.0
    %362 = vmatprep.subr.mxu0 0.0
    %363 = vmatpush1.msra.mxu0 0.0
    %364 = vmatprep.mubr.f32.mxu0 0.0
    %365 = vmatmul.mubr.f32.gmra.mrb[0].mxu0 %v298
    %v366 = vpop.f32.mrb[0].mxu0
    %v367 = vadd.f32 %v295, %v366
    %v368 = vpop.f32.mrb[0].mxu0
    %369 = vdwg.mxu0
    %370 = vst.msk [vmem:[#allocation4] sm:$0x3] %vm205, %v367
    // Predicated region
    $region38: #{tpu_custom_call.1} parent=1 // pred_check
      _
    $region39: #{tpu_custom_call.1} parent=1 // pred_check_branch
      %372 = sbr.rel (0) target = $region41
    $region40: #{tpu_custom_call.1} parent=1 // pred_region
      %s374 = ssub.s32 32, 32
      %375 = vsyncadd [#allocation3], %s374
      %s377 = sshll.u32 [#allocation2], 4
      %s378 = int_to_ptr.vmem [resolvable:$true] %s377
      %380 = dma.vmem_to_hbm [thread:$0]  %s378, 32, %s9, [#allocation3]
    $region41: #{tpu_custom_call.1} parent=1 // pred_fallthru
      _
    // Predicated region
    $region42: #{tpu_custom_call.1} parent=1 // pred_check
      _
    $region43: #{tpu_custom_call.1} parent=1 // pred_check_branch
      %382 = sbr.rel (0) target = $region45
    $region44: #{tpu_custom_call.1} parent=1 // pred_region
      %s384 = ssub.s32 32, 32
      %385 = vsyncadd [#allocation5], %s384
      %s387 = sshll.u32 [#allocation4], 4
      %s388 = int_to_ptr.vmem [resolvable:$true] %s387
      %390 = dma.vmem_to_hbm [thread:$0]  %s388, 32, %s10, [#allocation5]
    $region45: #{tpu_custom_call.1} parent=1 // pred_fallthru
      _
    // Predicated region
    $region46: #{tpu_custom_call.1} parent=1 // pred_check
      _
    $region47: #{tpu_custom_call.1} parent=1 // pred_check_branch
      %392 = sbr.rel (0) target = $region49
    $region48: #{tpu_custom_call.1} parent=1 // pred_region
      %393 = dma.done [#allocation3], 32
    $region49: #{tpu_custom_call.1} parent=1 // pred_fallthru
      _
    // Predicated region
    $region50: #{tpu_custom_call.1} parent=1 // pred_check
      _
    $region51: #{tpu_custom_call.1} parent=1 // pred_check_branch
      %395 = sbr.rel (0) target = $region53
    $region52: #{tpu_custom_call.1} parent=1 // pred_region
      %396 = dma.done [#allocation5], 32
    $region53: #{tpu_custom_call.1} parent=1 // pred_fallthru
      _
    %397 = vsyncpa [#allocation3], 1
    %398 = vsyncpa [#allocation5], 1

</llo_original>
